<compile_context>
chip_gen: v5e
topology: v5e:2x2
jax: 0.10.0
libtpu: 0.0.40
codegen_flags: <defaults>
</compile_context>

<pallas_src>
import math
import functools

import jax
import jax.numpy as jnp
from jax import lax
from jax.experimental import pallas as pl
from jax.experimental.pallas import tpu as pltpu

_LANE = 128
_TARGET_BLOCK_ELEMS = 512 * 1024          # ~2 MiB f32 per block in the two-pass path
_FUSED_MAX_ELEMS = 512 * 1024             # fused single-pass if n <= this (safe on v7x VMEM)
_VMEM_LIMIT_BYTES = 32 * 1024 * 1024      # safe on v5e / v6e / v7x


def _select_scale(r):
    """Adaptive scale selection from the global |x| max (matches the module)."""
    return jnp.where(
        r < 0.02, 50.0,
        jnp.where(r < 0.05, 20.0,
                  jnp.where(r < 0.1, 10.0,
                            jnp.where(r < 0.5, 4.0, 1.0)))).astype(jnp.float32)


def _fused_kernel(x_ref, o_ref):
    """Single-block fast path: max|x| -> scale -> quantize, one HBM read/write."""
    x = x_ref[...].astype(jnp.float32)
    scale = _select_scale(jnp.max(jnp.abs(x)))
    o_ref[...] = (jnp.round(x * scale) / scale).astype(o_ref.dtype)


def _maxabs_scale_kernel(x_ref, scale_ref, vacc_ref, *,
                         block_rows, width, total_rows, acc_rows):
    """Pass 1: VPU-only running per-lane max; scale selected at the last step."""
    i = pl.program_id(0)

    @pl.when(i == 0)
    def _():
        vacc_ref[...] = jnp.zeros_like(vacc_ref)

    a = jnp.abs(x_ref[...].astype(jnp.float32))
    if total_rows % block_rows != 0:
        # Ragged last block: out-of-bounds rows hold undefined data; mask to 0
        # (zero never increases the max).
        row_id = i * block_rows + lax.broadcasted_iota(
            jnp.int32, (block_rows, width), 0)
        a = jnp.where(row_id < total_rows, a, 0.0)

    # Reduce only the leading axis (elementwise jnp.maximum over vregs, no XLU)
    # into the small (acc_rows, width) accumulator; the single cross-lane/
    # sublane reduce happens once at the last grid step below.
    part = jnp.max(a.reshape(block_rows // acc_rows, acc_rows, width), axis=0)
    vacc_ref[...] = jnp.maximum(vacc_ref[...], part)

    @pl.when(i == pl.num_programs(0) - 1)
    def _():
        scale_ref[0, 0] = _select_scale(jnp.max(vacc_ref[...]))


def _quantize_kernel(scale_ref, x_ref, o_ref):
    """Pass 2: y = round(x * s) / s, stored directly in the original dtype."""
    s = scale_ref[0, 0]
    x = x_ref[...].astype(jnp.float32)
    o_ref[...] = (jnp.round(x * s) / s).astype(o_ref.dtype)


def _pick_width(n):
    """Widest lane-dense slab width that divides n (else 128 + padding)."""
    for w in (1024, 512, 256, 128):
        if n % w == 0:
            return w
    return _LANE


def improved_quantizer_vnvc(x, *, force_two_pass=False, block_rows=None):
    """Pallas implementation of ImprovedQuantizerVNVC.forward (inference path).

    # TODO(synk): the training-only uniform(-0.5,0.5) noise branch of
    # AdaptiveRoundWithNoise (active only when input grads are required) is not
    # reproduced; this implements the deterministic round path.
    """
    orig_shape = x.shape
    orig_dtype = x.dtype
    n = int(x.size)

    xf = x.reshape(-1)                      # no dtype cast: kernels cast in VMEM
    width = _pick_width(n)
    pad = (-n) % width
    if pad:
        # TODO(synk): rare fallback (n not a multiple of 128) costs one HBM copy.
        xf = jnp.pad(xf, (0, pad))
    rows = (n + pad) // width
    x2d = xf.reshape(rows, width)

    if (n <= _FUSED_MAX_ELEMS) and not force_two_pass:
        # Fused single-pass path: read x once, write y once (2N HBM traffic).
        y2d = pl.pallas_call(
            _fused_kernel,
            out_shape=jax.ShapeDtypeStruct((rows, width), orig_dtype),
            grid=(1,),
            in_specs=[pl.BlockSpec((rows, width), lambda i: (0, 0))],
            out_specs=pl.BlockSpec((rows, width), lambda i: (0, 0)),
            compiler_params=pltpu.CompilerParams(
                dimension_semantics=("arbitrary",),
                vmem_limit_bytes=_VMEM_LIMIT_BYTES),
        )(x2d)
    else:
        # Two-pass path with multi-MiB lane-dense blocks.
        if block_rows is None:
            block_rows = max(8, _TARGET_BLOCK_ELEMS // width)
        if rows >= 8:
            block_rows = min(block_rows, (rows // 8) * 8)   # multiple of 8
        else:
            block_rows = rows                               # full-dim block
        acc_rows = math.gcd(block_rows, 8)
        num_blocks = -(-rows // block_rows)

        p1 = functools.partial(_maxabs_scale_kernel,
                               block_rows=block_rows, width=width,
                               total_rows=rows, acc_rows=acc_rows)
        scale = pl.pallas_call(
            p1,
            out_shape=jax.ShapeDtypeStruct((1, 1), jnp.float32),
            grid=(num_blocks,),
            in_specs=[pl.BlockSpec((block_rows, width), lambda i: (i, 0))],
            out_specs=pl.BlockSpec(memory_space=pltpu.SMEM),
            scratch_shapes=[pltpu.VMEM((acc_rows, width), jnp.float32)],
            compiler_params=pltpu.CompilerParams(
                dimension_semantics=("arbitrary",),
                vmem_limit_bytes=_VMEM_LIMIT_BYTES),
        )(x2d)
        # TODO(synk): on v7x the max reduction could be split across the two
        # TensorCores (parallel leading axis + combine); kept single-TC here.

        y2d = pl.pallas_call(
            _quantize_kernel,
            out_shape=jax.ShapeDtypeStruct((rows, width), orig_dtype),
            grid=(num_blocks,),
            in_specs=[
                pl.BlockSpec(memory_space=pltpu.SMEM),               # scale
                pl.BlockSpec((block_rows, width), lambda i: (i, 0)),  # x tile
            ],
            out_specs=pl.BlockSpec((block_rows, width), lambda i: (i, 0)),
            compiler_params=pltpu.CompilerParams(
                dimension_semantics=("parallel",),
                vmem_limit_bytes=_VMEM_LIMIT_BYTES),
        )(scale, x2d)

    y = y2d.reshape(-1)
    if pad:
        y = y[:n]
    return y.reshape(orig_shape)


def _reference(x):
    """Pure-JAX reference mirroring the PyTorch inference semantics."""
    xf = x.astype(jnp.float32)
    r = jnp.max(jnp.abs(xf))
    scale = jnp.where(
        r < 0.02, 50.0,
        jnp.where(r < 0.05, 20.0,
                  jnp.where(r < 0.1, 10.0,
                            jnp.where(r < 0.5, 4.0, 1.0))))
    return (jnp.round(xf * scale) / scale).astype(x.dtype)


if __name__ == "__main__":
    key = jax.random.PRNGKey(0)
    k1, k2, k3 = jax.random.split(key, 3)

    # 1) Small NCHW input -> fused single-pass path (r < 0.1 branch, scale=10).
    x1 = jax.random.uniform(k1, (2, 4, 16, 16), jnp.float32,
                            minval=-0.08, maxval=0.08)
    y1 = improved_quantizer_vnvc(x1)

    # 2) Latent-like input forced through the two-pass path with a ragged last
    #    row-block (rows=12, block_rows=8) to exercise the in-kernel mask.
    x2 = jax.random.uniform(k2, (1, 192, 8, 8), jnp.float32,
                            minval=-0.4, maxval=0.4)
    y2 = improved_quantizer_vnvc(x2, force_two_pass=True, block_rows=8)

    # 3) Odd-sized input exercising the padded fallback (n % 128 != 0).
    x3 = jax.random.uniform(k3, (2, 3, 7, 7), jnp.float32,
                            minval=-0.03, maxval=0.03)
    y3 = improved_quantizer_vnvc(x3)

    jax.block_until_ready((y1, y2, y3))

    for x, y in ((x1, y1), (x2, y2), (x3, y3)):
        y_ref = _reference(x)
        assert y.shape == x.shape and y.dtype == x.dtype
        assert jnp.allclose(y, y_ref, atol=1e-6), "mismatch vs reference"

    print("KERNEL_OK")
</pallas_src>

<mosaic_0001>
module attributes {stable_mosaic.version = 11 : i64} {
  func.func @_fused_kernel(%arg0: i32, %arg1: memref<2x1024xf32, #tpu.memory_space<vmem>>, %arg2: memref<2x1024xf32, #tpu.memory_space<vmem>>) attributes {dimension_semantics = [#tpu.dimension_semantics<arbitrary>], iteration_bounds = array<i64: 1>, scalar_prefetch = 0 : i64, scratch_operands = 0 : i64, tpu.core_type = #tpu.core_type<tc>, window_params = [{pipeline_mode = #tpu.pipeline_mode<synchronous>, transform_indices = @transform_0, window_bounds = array<i64: 2, 1024>}, {pipeline_mode = #tpu.pipeline_mode<synchronous>, transform_indices = @transform_1, window_bounds = array<i64: 2, 1024>}]} {
    %c0 = arith.constant 0 : index
    %c0_0 = arith.constant 0 : index
    %0 = vector.load %arg1[%c0, %c0_0] : memref<2x1024xf32, #tpu.memory_space<vmem>>, vector<2x1024xf32>
    %1 = math.absf %0 : vector<2x1024xf32>
    %2 = vector.shape_cast %1 : vector<2x1024xf32> to vector<1x2x1024xf32>
    %cst = arith.constant dense<0xFF800000> : vector<1xf32>
    %3 = vector.multi_reduction <maximumf>, %2, %cst [1, 2] : vector<1x2x1024xf32> to vector<1xf32>
    %4 = vector.shape_cast %3 : vector<1xf32> to vector<1x1x1xf32>
    %5 = vector.extract %4[0, 0, 0] : f32 from vector<1x1x1xf32>
    %cst_1 = arith.constant 2.000000e-02 : f32
    %6 = arith.cmpf olt, %5, %cst_1 : f32
    %cst_2 = arith.constant 5.000000e-02 : f32
    %7 = arith.cmpf olt, %5, %cst_2 : f32
    %cst_3 = arith.constant 1.000000e-01 : f32
    %8 = arith.cmpf olt, %5, %cst_3 : f32
    %cst_4 = arith.constant 5.000000e-01 : f32
    %9 = arith.cmpf olt, %5, %cst_4 : f32
    %cst_5 = arith.constant 4.000000e+00 : f32
    %cst_6 = arith.constant 1.000000e+00 : f32
    %10 = arith.select %9, %cst_5, %cst_6 : f32
    %cst_7 = arith.constant 1.000000e+01 : f32
    %11 = arith.select %8, %cst_7, %10 : f32
    %cst_8 = arith.constant 2.000000e+01 : f32
    %12 = arith.select %7, %cst_8, %11 : f32
    %cst_9 = arith.constant 5.000000e+01 : f32
    %13 = arith.select %6, %cst_9, %12 : f32
    %14 = vector.broadcast %13 : f32 to vector<2x1024xf32>
    %15 = arith.mulf %0, %14 : vector<2x1024xf32>
    %16 = math.roundeven %15 : vector<2x1024xf32>
    %17 = vector.broadcast %13 : f32 to vector<2x1024xf32>
    %18 = arith.divf %16, %17 : vector<2x1024xf32>
    %c0_10 = arith.constant 0 : index
    %c0_11 = arith.constant 0 : index
    %19 = vector.load %arg2[%c0_10, %c0_11] : memref<2x1024xf32, #tpu.memory_space<vmem>>, vector<2x1024xf32>
    tpu.vector_store %arg2[%c0_10, %c0_11], %18 {strides = array<i32>} : memref<2x1024xf32, #tpu.memory_space<vmem>>, vector<2x1024xf32>,
    return
  }
  func.func @transform_0(%arg0: i32) -> (i32, i32) {
    %c0_i32 = arith.constant 0 : i32
    %c0_i32_0 = arith.constant 0 : i32
    %c0_i32_1 = arith.constant 0 : i32
    return %c0_i32, %c0_i32_0 : i32, i32
  }
  func.func @transform_1(%arg0: i32) -> (i32, i32) {
    %c0_i32 = arith.constant 0 : i32
    %c0_i32_0 = arith.constant 0 : i32
    %c0_i32_1 = arith.constant 0 : i32
    return %c0_i32, %c0_i32_0 : i32, i32
  }
}

</mosaic_0001>

<llo_original>
// kernel: tpu_custom_call.1
$region0: #{tpu_custom_call.1}
  #allocation0 [shape = 'u32[]', space=smem, size = 0x4, offset = 0x4, fixed_abs, tag = 'smem constant byte address 0x4 - core index']
  #allocation1 [shape = 'u32[72,128]{1,0:T(1,128)}', space=vmem, size = 0x9000, scoped, tag = 'internal scratch']
  %s0 = inlined_call_operand.hbm [shape: f32[2,1024], index: 0, kind: input, shape index: {}]
  %s1 = inlined_call_operand.hbm [shape: f32[2,1024], index: 1, kind: output, shape index: {}]
  %s2 = sld [smem:[#allocation0]]
  $region18: #{tpu_custom_call.1} parent=0
    _
  %s4 = ssub.s32 1, %s2
  %s5 = scalar_select 0, %s4, %s2
  $region1: #{tpu_custom_call.1} parent=0
    #allocation2 [shape = 'u8[8192]{0}', space=vmem, size = 0x2000, scoped, tag = 'input window, operand 0, single buffered']
    #allocation3 [shape = 's32[1]{0}', space=sflag, size = 0x4, scoped, tag = 'scoped memory for tpu_custom_call.1']
    #allocation4 [shape = 's32[1]{0}', space=sflag, size = 0x4, scoped, tag = 'scoped memory for tpu_custom_call.1']
    #allocation5 [shape = 'u8[8192]{0}', space=vmem, size = 0x2000, scoped, tag = 'output window, operand 0, single buffered']
    %6 = vsyncpa [#allocation3], 0
    %7 = vsyncpa [#allocation4], 0
    // Predicated region
    $region2: #{tpu_custom_call.1} parent=1 // pred_check
      _
    $region3: #{tpu_custom_call.1} parent=1 // pred_check_branch
      %9 = sbr.rel (0) target = $region5
    $region4: #{tpu_custom_call.1} parent=1 // pred_region
      %11 = vsyncadd [#allocation3], 0
      %s13 = sshll.u32 %s0, 4
      %s14 = int_to_ptr.hbm [resolvable:$true] %s13
      %s15 = sshll.u32 [#allocation2], 4
      %s16 = int_to_ptr.vmem [resolvable:$true] %s15
      %18 = dma.hbm_to_vmem [thread:$0]  %s14, 256, %s16, [#allocation3]
    $region5: #{tpu_custom_call.1} parent=1 // pred_fallthru
      _
    // Predicated region
    $region6: #{tpu_custom_call.1} parent=1 // pred_check
      _
    $region7: #{tpu_custom_call.1} parent=1 // pred_check_branch
      %20 = sbr.rel (0) target = $region9
    $region8: #{tpu_custom_call.1} parent=1 // pred_region
      %22 = dma.done [#allocation3], 256
    $region9: #{tpu_custom_call.1} parent=1 // pred_fallthru
      _
    %v23 = vld [vmem:[#allocation2] sm:$0xff]
    %v24 = vld [vmem:[#allocation2 + $0x8] sm:$0xff]
    %v25 = vand.u32 2147483647, %v23
    %v26 = vand.u32 2147483647, %v24
    %29 = vst [vmem:[#allocation1] ss:$4 sm:$0xff] %v25
    %s30 = scalar_lea.vmem [#allocation1], 32
    %31 = vst [vmem:[%s30] ss:$4 sm:$0xff] %v26
    %v32 = vld.sshfl [vmem:[#allocation1] sm:$0xff pattern:$0x73625140]
    %v33 = vld.sshfl [vmem:[#allocation1 + $0x8] sm:$0xff pattern:$0x73625140]
    %v34 = vld.sshfl [vmem:[#allocation1 + $0x10] sm:$0xff pattern:$0x73625140]
    %v35 = vld.sshfl [vmem:[#allocation1 + $0x18] sm:$0xff pattern:$0x73625140]
    %v36 = vld.sshfl [vmem:[#allocation1 + $0x20] sm:$0xff pattern:$0x73625140]
    %v37 = vld.sshfl [vmem:[#allocation1 + $0x28] sm:$0xff pattern:$0x73625140]
    %v38 = vld.sshfl [vmem:[#allocation1 + $0x30] sm:$0xff pattern:$0x73625140]
    %v39 = vld.sshfl [vmem:[#allocation1 + $0x38] sm:$0xff pattern:$0x73625140]
    %vm48 = vcmask 1041408
    %v49 = vsel %vm48, %v32, -inf
    %v50 = vsel %vm48, %v33, -inf
    %v51 = vsel %vm48, %v34, -inf
    %v52 = vsel %vm48, %v35, -inf
    %v53 = vsel %vm48, %v36, -inf
    %v54 = vmax.f32 %v49, %v53
    %v55 = vsel %vm48, %v37, -inf
    %v56 = vmax.f32 %v50, %v55
    %v57 = vsel %vm48, %v38, -inf
    %v58 = vmax.f32 %v51, %v57
    %v59 = vsel %vm48, %v39, -inf
    %v60 = vmax.f32 %v52, %v59
    %v61 = vmax.f32 %v54, %v56
    %v62 = vmax.f32 %v58, %v60
    %v63 = vmax.f32 %v61, %v62
    %64 = vmax.xlane.f32.xlu0 %v63
    %v65 = vpop.xlane.xlu0 %64
    %v66 = vrot.slane %v65, 4
    %v67 = vmax.f32 %v65, %v66
    %v68 = vrot.slane %v67, 2
    %v69 = vmax.f32 %v67, %v68
    %v70 = vrot.slane %v69, 1
    %v71 = vmax.f32 %v69, %v70
    %s72 = vtos %v71
    %p73 = scmp.lt.f32.partialorder %s72, 0.02
    %p74 = scmp.lt.f32.partialorder %s72, 0.05
    %p75 = scmp.lt.f32.partialorder %s72, 0.1
    %p76 = scmp.lt.f32.partialorder %s72, 0.5
    %s77 = scalar_select %p76, 4.0, 1.0
    %s78 = scalar_select %p75, 10.0, %s77
    %s79 = scalar_select %p74, 20.0, %s78
    %s80 = scalar_select %p73, 50.0, %s79
    %v81 = vstv %s80
    %v82 = vmul.f32 %v23, %v81
    %v83 = vmul.f32 %v24, %v81
    %v84 = vround.ne.pseudo %v82
    %v85 = vround.ne.pseudo %v83
    %v86 = vrcp.pop %v81
    %v87 = vmul.f32 %v81, %v86
    %v88 = vsub.f32 1.0, %v87
    %v89 = vmul.f32 %v86, %v88
    %v90 = vadd.f32 %v86, %v89
    %vm91 = vweird.f32 %v81
    %vm92 = vweird.f32 %v86
    %vm93 = vmor %vm91, %vm92
    %v94 = vsel %vm93, %v86, %v90
    %v95 = vand.u32 2147483647, %v81
    %vm96 = vcmp.eq.f32.partialorder %v95, 8.507059e+37
    %v97 = vand.u32 %v81, 2147483648
    %v98 = vor.u32 1.1754944e-38, %v97
    %v99 = vsel %vm96, %v98, %v94
    %v100 = vmul.f32 %v84, %v99
    %v101 = vmul.f32 %v85, %v99
    %102 = vst [vmem:[#allocation5] sm:$0xff] %v100
    %103 = vst [vmem:[#allocation5 + $0x8] sm:$0xff] %v101
    // Predicated region
    $region10: #{tpu_custom_call.1} parent=1 // pred_check
      _
    $region11: #{tpu_custom_call.1} parent=1 // pred_check_branch
      %105 = sbr.rel (0) target = $region13
    $region12: #{tpu_custom_call.1} parent=1 // pred_region
      %107 = vsyncadd [#allocation4], 0
      %s109 = sshll.u32 [#allocation5], 4
      %s110 = int_to_ptr.vmem [resolvable:$true] %s109
      %s111 = sshll.u32 %s1, 4
      %s112 = int_to_ptr.hbm [resolvable:$true] %s111
      %114 = dma.vmem_to_hbm [thread:$0]  %s110, 256, %s112, [#allocation4]
    $region13: #{tpu_custom_call.1} parent=1 // pred_fallthru
      _
    // Predicated region
    $region14: #{tpu_custom_call.1} parent=1 // pred_check
      _
    $region15: #{tpu_custom_call.1} parent=1 // pred_check_branch
      %116 = sbr.rel (0) target = $region17
    $region16: #{tpu_custom_call.1} parent=1 // pred_region
      %118 = dma.done [#allocation4], 256
    $region17: #{tpu_custom_call.1} parent=1 // pred_fallthru
      _
    %119 = vsyncpa [#allocation3], 1
    %120 = vsyncpa [#allocation4], 1

</llo_original>
